<compile_context>
chip_gen: v7x
topology: tpu7x:2x2x1
jax: 0.10.0
libtpu: 0.0.40
codegen_flags: <defaults>
</compile_context>

<pallas_src>
import math
import jax
import jax.numpy as jnp
from jax.experimental import pallas as pl
from jax.experimental.pallas import tpu as pltpu

_INV_SQRT2 = 1.0 / math.sqrt(2.0)


def _ffn_kernel(x_ref, w1_ref, b1_ref, w2_ref, b2_ref, o_ref, acc_ref):
    # x_ref:  (C, ts)      spatial-column tile of one image (channels on sublanes)
    # w1_ref: (tk, C)      chunk of first 1x1-conv weight (out x in)
    # b1_ref: (tk, 1)
    # w2_ref: (C, tk)      chunk of second 1x1-conv weight (out x in)
    # b2_ref: (C, 1)
    # o_ref:  (C, ts)      output tile (lane-dense: ts is a multiple of 128)
    # acc_ref:(C, ts) f32  accumulator over hidden-dim chunks
    j = pl.program_id(2)

    @pl.when(j == 0)
    def _():
        acc_ref[...] = jnp.zeros_like(acc_ref)

    # MXU dot in native operand dtype (bf16 on v6e/v7x models), f32 accumulate.
    h = jnp.dot(w1_ref[...], x_ref[...], preferred_element_type=jnp.float32)
    h = h + b1_ref[...].astype(jnp.float32)
    # Exact (erf-based) GELU in f32, matching torch.nn.GELU() default.
    h = 0.5 * h * (1.0 + jax.lax.erf(h * _INV_SQRT2))

    acc_ref[...] += jnp.dot(w2_ref[...], h.astype(w2_ref.dtype),
                            preferred_element_type=jnp.float32)

    @pl.when(j == pl.num_programs(2) - 1)
    def _():
        o_ref[...] = (acc_ref[...]
                      + b2_ref[...].astype(jnp.float32)).astype(o_ref.dtype)


def _round_up(a, b):
    return ((a + b - 1) // b) * b


def feedforward_pallas(x_nchw, w1, b1, w2, b2, *, ts=512, tk=1024):
    """out = Conv1x1(GELU(Conv1x1(x)));  x: (N, C, H, W).

    w1: (Ch, C), b1: (Ch,), w2: (C, Ch), b2: (C,)  (1x1 kernels squeezed).
    `ts`  : spatial (lane) tile size, multiple of 128.
    `tk`  : hidden-dimension reduction tile (multiple of 128 when < Ch).
    """
    N, C, H, W = x_nchw.shape
    Ch = w1.shape[0]
    HW = H * W

    # NCHW -> (N, C, H*W): a free reshape, no transpose / extra HBM pass.
    x3d = x_nchw.reshape(N, C, HW)

    # Spatial (lane) tiling: pad H*W up to a multiple of the tile.
    ts_eff = min(ts, _round_up(HW, 128))
    HW_pad = _round_up(HW, ts_eff)
    if HW_pad != HW:
        x3d = jnp.pad(x3d, ((0, 0), (0, 0), (0, HW_pad - HW)))

    # Hidden-dimension (reduction) tiling: keep only a chunk of each weight
    # resident per grid step (zero-padded chunks contribute exactly zero).
    tk_eff = Ch if Ch <= tk else tk
    Ch_pad = _round_up(Ch, tk_eff)
    if Ch_pad != Ch:
        w1 = jnp.pad(w1, ((0, Ch_pad - Ch), (0, 0)))
        b1 = jnp.pad(b1, ((0, Ch_pad - Ch),))
        w2 = jnp.pad(w2, ((0, 0), (0, Ch_pad - Ch)))

    b1_c = b1.reshape(Ch_pad, 1)
    b2_c = b2.reshape(C, 1)

    grid = (N, HW_pad // ts_eff, Ch_pad // tk_eff)

    out3d = pl.pallas_call(
        _ffn_kernel,
        out_shape=jax.ShapeDtypeStruct((N, C, HW_pad), x_nchw.dtype),
        grid_spec=pltpu.PrefetchScalarGridSpec(
            num_scalar_prefetch=0,
            grid=grid,
            in_specs=[
                pl.BlockSpec((None, C, ts_eff), lambda n, s, j: (n, 0, s)),  # x tile
                pl.BlockSpec((tk_eff, C), lambda n, s, j: (j, 0)),           # W1 chunk
                pl.BlockSpec((tk_eff, 1), lambda n, s, j: (j, 0)),           # b1 chunk
                pl.BlockSpec((C, tk_eff), lambda n, s, j: (0, j)),           # W2 chunk
                pl.BlockSpec((C, 1), lambda n, s, j: (0, 0)),                # b2
            ],
            out_specs=pl.BlockSpec((None, C, ts_eff), lambda n, s, j: (n, 0, s)),
            scratch_shapes=[pltpu.VMEM((C, ts_eff), jnp.float32)],
        ),
        compiler_params=pltpu.CompilerParams(
            dimension_semantics=("parallel", "parallel", "arbitrary"),
            vmem_limit_bytes=64 * 1024 * 1024,
        ),
    )(x3d, w1, b1_c, w2, b2_c)

    out3d = out3d[:, :, :HW]
    return out3d.reshape(N, C, H, W)


def init_params(key, dim, mult=4, dtype=jnp.float32):
    """Shapes/init mirroring Conv2d(dim, dim*mult, 1) / Conv2d(dim*mult, dim, 1)."""
    hidden = dim * mult
    k1, k2, k3, k4 = jax.random.split(key, 4)
    lim1 = 1.0 / math.sqrt(dim)
    lim2 = 1.0 / math.sqrt(hidden)
    w1 = jax.random.uniform(k1, (hidden, dim), dtype, -lim1, lim1)   # (out, in)
    b1 = jax.random.uniform(k2, (hidden,), dtype, -lim1, lim1)
    w2 = jax.random.uniform(k3, (dim, hidden), dtype, -lim2, lim2)
    b2 = jax.random.uniform(k4, (dim,), dtype, -lim2, lim2)
    return w1, b1, w2, b2


def _reference(x, w1, b1, w2, b2):
    N, C, H, W = x.shape
    x2d = jnp.transpose(x, (0, 2, 3, 1)).reshape(-1, C)
    h = x2d @ w1.T + b1
    h = 0.5 * h * (1.0 + jax.lax.erf(h * _INV_SQRT2))
    o2d = h @ w2.T + b2
    return jnp.transpose(o2d.reshape(N, H, W, C), (0, 3, 1, 2))


if __name__ == "__main__":
    key = jax.random.PRNGKey(0)
    kx1, kp1, kx2, kp2 = jax.random.split(key, 4)

    # Test 1: shapes implied by the module (dim=4, mult=4), spatial 16x16.
    N, C, H, W = 2, 4, 16, 16
    x = jax.random.normal(kx1, (N, C, H, W), jnp.float32)
    w1, b1, w2, b2 = init_params(kp1, C, mult=4)

    out = feedforward_pallas(x, w1, b1, w2, b2)
    out = jax.block_until_ready(out)
    ref = _reference(x, w1, b1, w2, b2)
    assert out.shape == (N, C, H, W)
    assert jnp.allclose(out, ref, atol=1e-4, rtol=1e-4)

    # Test 2: exercise hidden-dim reduction tiling + spatial padding
    # (dim=8, mult=32 -> Ch=256 split into two tk=128 chunks; HW=64 padded to 128).
    N2, C2, H2, W2 = 2, 8, 8, 8
    x2 = jax.random.normal(kx2, (N2, C2, H2, W2), jnp.float32)
    w1b, b1b, w2b, b2b = init_params(kp2, C2, mult=32)

    out2 = feedforward_pallas(x2, w1b, b1b, w2b, b2b, ts=128, tk=128)
    out2 = jax.block_until_ready(out2)
    ref2 = _reference(x2, w1b, b1b, w2b, b2b)
    assert out2.shape == (N2, C2, H2, W2)
    assert jnp.allclose(out2, ref2, atol=1e-4, rtol=1e-4)

    print("KERNEL_OK")
</pallas_src>

<mosaic_0001>
module attributes {stable_mosaic.version = 11 : i64} {
  func.func @_ffn_kernel(%arg0: i32, %arg1: i32, %arg2: i32, %arg3: memref<1x4x256xf32, #tpu.memory_space<vmem>>, %arg4: memref<16x4xf32, #tpu.memory_space<vmem>>, %arg5: memref<16x1xf32, #tpu.memory_space<vmem>>, %arg6: memref<4x16xf32, #tpu.memory_space<vmem>>, %arg7: memref<4x1xf32, #tpu.memory_space<vmem>>, %arg8: memref<1x4x256xf32, #tpu.memory_space<vmem>>, %arg9: memref<4x256xf32, #tpu.memory_space<vmem>>) attributes {dimension_semantics = [#tpu.dimension_semantics<parallel>, #tpu.dimension_semantics<parallel>, #tpu.dimension_semantics<arbitrary>], iteration_bounds = array<i64: 2, 1, 1>, scalar_prefetch = 0 : i64, scratch_operands = 1 : i64, tpu.core_type = #tpu.core_type<tc>, window_params = [{transform_indices = @transform_0, window_bounds = array<i64: 1, 4, 256>}, {transform_indices = @transform_1, window_bounds = array<i64: 16, 4>}, {transform_indices = @transform_2, window_bounds = array<i64: 16, 1>}, {transform_indices = @transform_3, window_bounds = array<i64: 4, 16>}, {pipeline_mode = #tpu.pipeline_mode<synchronous>, transform_indices = @transform_4, window_bounds = array<i64: 4, 1>}, {transform_indices = @transform_5, window_bounds = array<i64: 1, 4, 256>}]} {
    %c0_i32 = arith.constant 0 : i32
    %0 = arith.cmpi eq, %arg2, %c0_i32 : i32
    %1 = arith.extui %0 : i1 to i32
    %c0_i32_0 = arith.constant 0 : i32
    %2 = arith.cmpi ne, %1, %c0_i32_0 : i32
    scf.if %2 {
      %cst_19 = arith.constant 0.000000e+00 : f32
      %26 = vector.broadcast %cst_19 : f32 to vector<4x256xf32>
      %c0_20 = arith.constant 0 : index
      %c0_21 = arith.constant 0 : index
      %27 = vector.load %arg9[%c0_20, %c0_21] : memref<4x256xf32, #tpu.memory_space<vmem>>, vector<4x256xf32>
      tpu.vector_store %arg9[%c0_20, %c0_21], %26 {strides = array<i32>} : memref<4x256xf32, #tpu.memory_space<vmem>>, vector<4x256xf32>,
    } else {
    }
    %c0 = arith.constant 0 : index
    %c0_1 = arith.constant 0 : index
    %3 = vector.load %arg4[%c0, %c0_1] : memref<16x4xf32, #tpu.memory_space<vmem>>, vector<16x4xf32>
    %c0_2 = arith.constant 0 : index
    %c0_3 = arith.constant 0 : index
    %c0_4 = arith.constant 0 : index
    %4 = vector.load %arg3[%c0_2, %c0_3, %c0_4] : memref<1x4x256xf32, #tpu.memory_space<vmem>>, vector<1x4x256xf32>
    %5 = vector.shape_cast %4 : vector<1x4x256xf32> to vector<4x256xf32>
    %cst = arith.constant dense<0.000000e+00> : vector<16x256xf32>
    %6 = tpu.matmul %3, %5, %cst {dimension_numbers = #tpu.dot_dimension_numbers<[1], [0], [0], [1], [0, 0, 1, 1], [], []>} : vector<16x4xf32>, vector<4x256xf32>, vector<16x256xf32> -> vector<16x256xf32>
    %c0_5 = arith.constant 0 : index
    %c0_6 = arith.constant 0 : index
    %7 = vector.load %arg5[%c0_5, %c0_6] : memref<16x1xf32, #tpu.memory_space<vmem>>, vector<16x1xf32>
    %8 = vector.broadcast %7 : vector<16x1xf32> to vector<16x256xf32>
    %9 = arith.addf %6, %8 : vector<16x256xf32>
    %cst_7 = arith.constant 5.000000e-01 : f32
    %10 = vector.broadcast %cst_7 : f32 to vector<16x256xf32>
    %11 = arith.mulf %10, %9 : vector<16x256xf32>
    %cst_8 = arith.constant 0.707106769 : f32
    %12 = vector.broadcast %cst_8 : f32 to vector<16x256xf32>
    %13 = arith.mulf %9, %12 : vector<16x256xf32>
    %14 = math.erf %13 : vector<16x256xf32>
    %cst_9 = arith.constant 1.000000e+00 : f32
    %15 = vector.broadcast %cst_9 : f32 to vector<16x256xf32>
    %16 = arith.addf %15, %14 : vector<16x256xf32>
    %17 = arith.mulf %11, %16 : vector<16x256xf32>
    %c0_10 = arith.constant 0 : index
    %c0_11 = arith.constant 0 : index
    %18 = vector.load %arg9[%c0_10, %c0_11] : memref<4x256xf32, #tpu.memory_space<vmem>>, vector<4x256xf32>
    %c0_12 = arith.constant 0 : index
    %c0_13 = arith.constant 0 : index
    %19 = vector.load %arg6[%c0_12, %c0_13] : memref<4x16xf32, #tpu.memory_space<vmem>>, vector<4x16xf32>
    %cst_14 = arith.constant dense<0.000000e+00> : vector<4x256xf32>
    %20 = tpu.matmul %19, %17, %cst_14 {dimension_numbers = #tpu.dot_dimension_numbers<[1], [0], [0], [1], [0, 0, 1, 1], [], []>} : vector<4x16xf32>, vector<16x256xf32>, vector<4x256xf32> -> vector<4x256xf32>
    %21 = arith.addf %18, %20 : vector<4x256xf32>
    %c0_15 = arith.constant 0 : index
    %c0_16 = arith.constant 0 : index
    %22 = vector.load %arg9[%c0_15, %c0_16] : memref<4x256xf32, #tpu.memory_space<vmem>>, vector<4x256xf32>
    tpu.vector_store %arg9[%c0_15, %c0_16], %21 {strides = array<i32>} : memref<4x256xf32, #tpu.memory_space<vmem>>, vector<4x256xf32>,
    %c0_i32_17 = arith.constant 0 : i32
    %23 = arith.cmpi eq, %arg2, %c0_i32_17 : i32
    %24 = arith.extui %23 : i1 to i32
    %c0_i32_18 = arith.constant 0 : i32
    %25 = arith.cmpi ne, %24, %c0_i32_18 : i32
    scf.if %25 {
      %c0_19 = arith.constant 0 : index
      %c0_20 = arith.constant 0 : index
      %26 = vector.load %arg9[%c0_19, %c0_20] : memref<4x256xf32, #tpu.memory_space<vmem>>, vector<4x256xf32>
      %c0_21 = arith.constant 0 : index
      %c0_22 = arith.constant 0 : index
      %27 = vector.load %arg7[%c0_21, %c0_22] : memref<4x1xf32, #tpu.memory_space<vmem>>, vector<4x1xf32>
      %28 = vector.broadcast %27 : vector<4x1xf32> to vector<4x256xf32>
      %29 = arith.addf %26, %28 : vector<4x256xf32>
      %c0_23 = arith.constant 0 : index
      %c0_24 = arith.constant 0 : index
      %c0_25 = arith.constant 0 : index
      %30 = vector.load %arg8[%c0_23, %c0_24, %c0_25] : memref<1x4x256xf32, #tpu.memory_space<vmem>>, vector<1x4x256xf32>
      %31 = vector.shape_cast %30 : vector<1x4x256xf32> to vector<4x256xf32>
      %32 = vector.shape_cast %29 : vector<4x256xf32> to vector<1x4x256xf32>
      tpu.vector_store %arg8[%c0_23, %c0_24, %c0_25], %32 {strides = array<i32>} : memref<1x4x256xf32, #tpu.memory_space<vmem>>, vector<1x4x256xf32>,
    } else {
    }
    return
  }
  func.func @transform_0(%arg0: i32, %arg1: i32, %arg2: i32) -> (i32, i32, i32) {
    %c0_i32 = arith.constant 0 : i32
    %c0_i32_0 = arith.constant 0 : i32
    return %arg0, %c0_i32, %arg1 : i32, i32, i32
  }
  func.func @transform_1(%arg0: i32, %arg1: i32, %arg2: i32) -> (i32, i32) {
    %c0_i32 = arith.constant 0 : i32
    %c0_i32_0 = arith.constant 0 : i32
    return %arg2, %c0_i32 : i32, i32
  }
  func.func @transform_2(%arg0: i32, %arg1: i32, %arg2: i32) -> (i32, i32) {
    %c0_i32 = arith.constant 0 : i32
    %c0_i32_0 = arith.constant 0 : i32
    return %arg2, %c0_i32 : i32, i32
  }
  func.func @transform_3(%arg0: i32, %arg1: i32, %arg2: i32) -> (i32, i32) {
    %c0_i32 = arith.constant 0 : i32
    %c0_i32_0 = arith.constant 0 : i32
    return %c0_i32, %arg2 : i32, i32
  }
  func.func @transform_4(%arg0: i32, %arg1: i32, %arg2: i32) -> (i32, i32) {
    %c0_i32 = arith.constant 0 : i32
    %c0_i32_0 = arith.constant 0 : i32
    %c0_i32_1 = arith.constant 0 : i32
    return %c0_i32, %c0_i32_0 : i32, i32
  }
  func.func @transform_5(%arg0: i32, %arg1: i32, %arg2: i32) -> (i32, i32, i32) {
    %c0_i32 = arith.constant 0 : i32
    %c0_i32_0 = arith.constant 0 : i32
    return %arg0, %c0_i32, %arg1 : i32, i32, i32
  }
}

</mosaic_0001>

<llo_original>
// kernel: tpu_custom_call.1
$region0: #{tpu_custom_call.1}
  #allocation0 [shape = 'u32[]', space=smem, size = 0x4, offset = 0x4, fixed_abs, tag = 'smem constant byte address 0x4 - core index']
  #allocation1 [shape = 'u32[144,128]{1,0:T(1,128)}', space=vmem, size = 0x12000, scoped, tag = 'internal scratch']
  #allocation2 [shape = 'f32[4,256]{1,0:T(4,128)}', space=vmem, size = 0x1000, scoped, tag = 'scratch operand']
  %s0 = inlined_call_operand.hbm [shape: f32[2,4,256], index: 0, kind: input, shape index: {}]
  %s1 = inlined_call_operand.hbm [shape: f32[16,4], index: 1, kind: input, shape index: {}]
  %s2 = inlined_call_operand.hbm [shape: f32[16,1], index: 2, kind: input, shape index: {}]
  %s3 = inlined_call_operand.hbm [shape: f32[4,16], index: 3, kind: input, shape index: {}]
  %s4 = inlined_call_operand.hbm [shape: f32[4,1], index: 4, kind: input, shape index: {}]
  %s5 = inlined_call_operand.hbm [shape: f32[2,4,256], index: 5, kind: output, shape index: {}]
  %s6 = sld [smem:[#allocation0]]
  $region81: #{tpu_custom_call.1} parent=0
    _
  %s8 = ssub.s32 1, %s6
  %s9 = scalar_select 0, %s8, %s6
  $region1: #{tpu_custom_call.1} parent=0
    #allocation3 [shape = 'u8[8192]{0}', space=vmem, size = 0x2000, scoped, tag = 'input window, operand 0']
    #allocation4 [shape = 's32[2]{0}', space=sflag, size = 0x8, scoped, tag = 'scoped memory for tpu_custom_call.1']
    #allocation5 [shape = 's32[2]{0}', space=sflag, size = 0x8, scoped, tag = 'scoped memory for tpu_custom_call.1']
    #allocation6 [shape = 'u8[8192]{0}', space=vmem, size = 0x2000, scoped, tag = 'input window, operand 1, single buffered']
    #allocation7 [shape = 's32[1]{0}', space=sflag, size = 0x4, scoped, tag = 'scoped memory for tpu_custom_call.1']
    #allocation8 [shape = 'u8[8192]{0}', space=vmem, size = 0x2000, scoped, tag = 'input window, operand 2, single buffered']
    #allocation9 [shape = 'u8[2048]{0}', space=vmem, size = 0x800, scoped, tag = 'input window, operand 3, single buffered']
    #allocation10 [shape = 's32[1]{0}', space=sflag, size = 0x4, scoped, tag = 'scoped memory for tpu_custom_call.1']
    #allocation11 [shape = 'u8[2048]{0}', space=vmem, size = 0x800, scoped, tag = 'input window, operand 4, single buffered']
    #allocation12 [shape = 'u8[8192]{0}', space=vmem, size = 0x2000, scoped, tag = 'output window, operand 0']
    %10 = vsyncpa [#allocation4], 0
    %s11 = scalar_lea.sflag [#allocation4], 1
    %12 = vsyncpa %s11, 0
    %13 = vsyncpa [#allocation7], 0
    %14 = vsyncpa [#allocation10], 0
    %15 = vsyncpa [#allocation5], 0
    %s16 = scalar_lea.sflag [#allocation5], 1
    %17 = vsyncpa %s16, 0
    loop: start=0, step=1, limit=4
    $region2: #{tpu_custom_call.1} parent=1 // loop_pre_header
      _
    $region3: #{tpu_custom_call.1} parent=1 // loop_header
      %s19 = sphi 0, %s23
      %p20 = scmp.ge.s32.totalorder %s19, 4
      %s26 = sphi 0, %s45
      %s27 = sphi 0, %s41
      %s28 = sphi 0, %s37
      %s29 = sphi 0, %s26
      %s30 = sphi 0, %s27
      %s31 = sphi 0, %s28
      %s32 = sphi 0, %s29
      %s33 = sphi 0, %s30
      %s34 = sphi 0, %s31
      %s50 = sphi 0, %s52
      %s53 = sphi 0, %s50
      %s54 = sphi 0, %s53
      %s70 = sphi 0, %s54
      %s76 = sphi 0, %s78
      %s79 = sphi 0, %s76
      %s80 = sphi 0, %s79
      %s96 = sphi 0, %s80
      %s102 = sphi 0, %s104
      %s105 = sphi 0, %s102
      %s106 = sphi 0, %s105
      %s122 = sphi 0, %s106
      %s128 = sphi 0, %s130
      %s131 = sphi 0, %s128
      %s132 = sphi 0, %s131
      %s148 = sphi 0, %s132
      %s152 = sphi 0, %s152
      %s154 = sphi 0, %s152
      %s155 = sphi 0, %s154
      %s169 = sphi 0, %s155
      %s177 = sphi 0, %s179
      %s180 = sphi 0, %s177
      %s181 = sphi 0, %s180
      %s197 = sphi 0, %s181
    $region4: #{tpu_custom_call.1} parent=1 // loop_header_branch
      %22 = sbr.rel (%p20) target = $region8
    $region5: #{tpu_custom_call.1} parent=1 // loop_body
      %s24 = ssub.s32 %s19, 1
      %s25 = ssub.s32 %s19, 2
      %s35 = sadd.s32 1, %s28
      %p36 = scmp.ge.s32.totalorder %s35, 1
      %s37 = scalar_select %p36, 0, %s35
      %s38 = sadd.s32 1, %s27
      %s39 = scalar_select %p36, %s38, %s27
      %p40 = scmp.ge.s32.totalorder %s39, 1
      %s41 = scalar_select %p40, 0, %s39
      %s42 = sadd.s32 1, %s26
      %s43 = scalar_select %p40, %s42, %s26
      %p44 = scmp.ge.s32.totalorder %s43, 2
      %s45 = scalar_select %p44, 0, %s43
      %s46 = ssub.s32 %s26, %s45
      %s47 = ssub.s32 %s27, %s41
      %s48 = sor.u32 %s46, %s47
      %p49 = scmp.eq.s32.totalorder %s48, 0
      %s51 = sadd.s32 %s50, 1
      %s52 = scalar_select %p49, %s50, %s51
      %p55 = pneg %p49
      %p56 = scmp.eq.s32.totalorder %s19, 1
      %p57 = por %p55, %p56
      %p58 = scmp.ne.s32.totalorder %s50, %s53
      %p59 = scmp.eq.s32.totalorder %s19, 0
      %p60 = por %p58, %p59
      %p61 = scmp.ne.s32.totalorder %s50, %s53
      %p62 = scmp.eq.s32.totalorder %s24, 1
      %p63 = por %p61, %p62
      %p64 = scmp.ne.s32.totalorder %s53, %s54
      %p65 = scmp.eq.s32.totalorder %s24, 0
      %p66 = por %p64, %p65
      %p67 = scmp.ne.s32.totalorder %s53, %s54
      %p68 = scmp.eq.s32.totalorder %s25, 1
      %p69 = por %p67, %p68
      %p71 = scmp.ne.s32.totalorder %s54, %s70
      %p72 = scmp.eq.s32.totalorder %s25, 0
      %p73 = por %p71, %p72
      %s74 = ssub.s32 %s28, %s37
      %p75 = scmp.eq.s32.totalorder %s74, 0
      %s77 = sadd.s32 %s76, 1
      %s78 = scalar_select %p75, %s76, %s77
      %p81 = pneg %p75
      %p82 = scmp.eq.s32.totalorder %s19, 1
      %p83 = por %p81, %p82
      %p84 = scmp.ne.s32.totalorder %s76, %s79
      %p85 = scmp.eq.s32.totalorder %s19, 0
      %p86 = por %p84, %p85
      %p87 = scmp.ne.s32.totalorder %s76, %s79
      %p88 = scmp.eq.s32.totalorder %s24, 1
      %p89 = por %p87, %p88
      %p90 = scmp.ne.s32.totalorder %s79, %s80
      %p91 = scmp.eq.s32.totalorder %s24, 0
      %p92 = por %p90, %p91
      %p93 = scmp.ne.s32.totalorder %s79, %s80
      %p94 = scmp.eq.s32.totalorder %s25, 1
      %p95 = por %p93, %p94
      %p97 = scmp.ne.s32.totalorder %s80, %s96
      %p98 = scmp.eq.s32.totalorder %s25, 0
      %p99 = por %p97, %p98
      %s100 = ssub.s32 %s28, %s37
      %p101 = scmp.eq.s32.totalorder %s100, 0
      %s103 = sadd.s32 %s102, 1
      %s104 = scalar_select %p101, %s102, %s103
      %p107 = pneg %p101
      %p108 = scmp.eq.s32.totalorder %s19, 1
      %p109 = por %p107, %p108
      %p110 = scmp.ne.s32.totalorder %s102, %s105
      %p111 = scmp.eq.s32.totalorder %s19, 0
      %p112 = por %p110, %p111
      %p113 = scmp.ne.s32.totalorder %s102, %s105
      %p114 = scmp.eq.s32.totalorder %s24, 1
      %p115 = por %p113, %p114
      %p116 = scmp.ne.s32.totalorder %s105, %s106
      %p117 = scmp.eq.s32.totalorder %s24, 0
      %p118 = por %p116, %p117
      %p119 = scmp.ne.s32.totalorder %s105, %s106
      %p120 = scmp.eq.s32.totalorder %s25, 1
      %p121 = por %p119, %p120
      %p123 = scmp.ne.s32.totalorder %s106, %s122
      %p124 = scmp.eq.s32.totalorder %s25, 0
      %p125 = por %p123, %p124
      %s126 = ssub.s32 %s28, %s37
      %p127 = scmp.eq.s32.totalorder %s126, 0
      %s129 = sadd.s32 %s128, 1
      %s130 = scalar_select %p127, %s128, %s129
      %p133 = pneg %p127
      %p134 = scmp.eq.s32.totalorder %s19, 1
      %p135 = por %p133, %p134
      %p136 = scmp.ne.s32.totalorder %s128, %s131
      %p137 = scmp.eq.s32.totalorder %s19, 0
      %p138 = por %p136, %p137
      %p139 = scmp.ne.s32.totalorder %s128, %s131
      %p140 = scmp.eq.s32.totalorder %s24, 1
      %p141 = por %p139, %p140
      %p142 = scmp.ne.s32.totalorder %s131, %s132
      %p143 = scmp.eq.s32.totalorder %s24, 0
      %p144 = por %p142, %p143
      %p145 = scmp.ne.s32.totalorder %s131, %s132
      %p146 = scmp.eq.s32.totalorder %s25, 1
      %p147 = por %p145, %p146
      %p149 = scmp.ne.s32.totalorder %s132, %s148
      %p150 = scmp.eq.s32.totalorder %s25, 0
      %p151 = por %p149, %p150
      %s153 = sadd.s32 %s152, 1
      %p156 = scmp.eq.s32.totalorder %s19, 1
      %p157 = scmp.ne.s32.totalorder %s152, %s154
      %p158 = scmp.eq.s32.totalorder %s19, 0
      %p159 = por %p157, %p158
      %p160 = scmp.ne.s32.totalorder %s152, %s154
      %p161 = scmp.eq.s32.totalorder %s24, 1
      %p162 = por %p160, %p161
      %p163 = scmp.ne.s32.totalorder %s154, %s155
      %p164 = scmp.eq.s32.totalorder %s24, 0
      %p165 = por %p163, %p164
      %p166 = scmp.ne.s32.totalorder %s154, %s155
      %p167 = scmp.eq.s32.totalorder %s25, 1
      %p168 = por %p166, %p167
      %p170 = scmp.ne.s32.totalorder %s155, %s169
      %p171 = scmp.eq.s32.totalorder %s25, 0
      %p172 = por %p170, %p171
      %s173 = ssub.s32 %s26, %s45
      %s174 = ssub.s32 %s27, %s41
      %s175 = sor.u32 %s173, %s174
      %p176 = scmp.eq.s32.totalorder %s175, 0
      %s178 = sadd.s32 %s177, 1
      %s179 = scalar_select %p176, %s177, %s178
      %p182 = pneg %p176
      %p183 = scmp.eq.s32.totalorder %s19, 1
      %p184 = por %p182, %p183
      %p185 = scmp.ne.s32.totalorder %s177, %s180
      %p186 = scmp.eq.s32.totalorder %s19, 0
      %p187 = por %p185, %p186
      %p188 = scmp.ne.s32.totalorder %s177, %s180
      %p189 = scmp.eq.s32.totalorder %s24, 1
      %p190 = por %p188, %p189
      %p191 = scmp.ne.s32.totalorder %s180, %s181
      %p192 = scmp.eq.s32.totalorder %s24, 0
      %p193 = por %p191, %p192
      %p194 = scmp.ne.s32.totalorder %s180, %s181
      %p195 = scmp.eq.s32.totalorder %s25, 1
      %p196 = por %p194, %p195
      %p198 = scmp.ne.s32.totalorder %s181, %s197
      %p199 = scmp.eq.s32.totalorder %s25, 0
      %p200 = por %p198, %p199
      %p201 = scmp.le.s32.totalorder 1, %s19
      %p202 = scmp.lt.s32.totalorder %s19, 3
      %p203 = pnand %p201, %p202
      %p204 = pneg %p203
      // Predicated region
      $region9: #{tpu_custom_call.1} parent=5 // pred_check
        _
      $region10: #{tpu_custom_call.1} parent=5 // pred_check_branch
        %206 = sbr.rel (%p203) target = $region12
      $region11: #{tpu_custom_call.1} parent=5 // pred_region
        %s207 = ssub.s32 %s19, 1
        // Predicated region
        $region13: #{tpu_custom_call.1} parent=11 // pred_check
          %p208 = pneg %p92
        $region14: #{tpu_custom_call.1} parent=11 // pred_check_branch
          %210 = sbr.rel (%p208) target = $region16
        $region15: #{tpu_custom_call.1} parent=11 // pred_region
          %s211 = smul.u32 2, %s31
          %s213 = ssub.s32 256, 256
          %214 = vsyncadd [#allocation7], %s213
          %s215 = smul.addr %s211, 128
          %s216 = scalar_lea.hbm %s1, %s215
          %s217 = sshll.u32 [#allocation6], 4
          %s218 = int_to_ptr.vmem [resolvable:$true] %s217
          %223 = dma.hbm_to_vmem [thread:$0]  %s216, 256, %s218, [#allocation7], 128, 128, 8
        $region16: #{tpu_custom_call.1} parent=11 // pred_fallthru
          _
        // Predicated region
        $region17: #{tpu_custom_call.1} parent=11 // pred_check
          %p224 = pneg %p118
        $region18: #{tpu_custom_call.1} parent=11 // pred_check_branch
          %226 = sbr.rel (%p224) target = $region20
        $region19: #{tpu_custom_call.1} parent=11 // pred_region
          %s227 = smul.u32 2, %s31
          %s229 = ssub.s32 256, 256
          %230 = vsyncadd [#allocation7], %s229
          %s231 = smul.addr %s227, 128
          %s232 = scalar_lea.hbm %s2, %s231
          %s233 = sshll.u32 [#allocation8], 4
          %s234 = int_to_ptr.vmem [resolvable:$true] %s233
          %239 = dma.hbm_to_vmem [thread:$0]  %s232, 256, %s234, [#allocation7], 128, 128, 8
        $region20: #{tpu_custom_call.1} parent=11 // pred_fallthru
          _
        // Predicated region
        $region21: #{tpu_custom_call.1} parent=11 // pred_check
          %p240 = pneg %p144
        $region22: #{tpu_custom_call.1} parent=11 // pred_check_branch
          %242 = sbr.rel (%p240) target = $region24
        $region23: #{tpu_custom_call.1} parent=11 // pred_region
          %s244 = ssub.s32 64, 64
          %245 = vsyncadd [#allocation10], %s244
          %s246 = smul.addr %s31, 64
          %s247 = scalar_lea.hbm %s3, %s246
          %s249 = sshll.u32 [#allocation9], 4
          %s250 = int_to_ptr.vmem [resolvable:$true] %s249
          %252 = dma.hbm_to_vmem [thread:$0]  %s247, 64, %s250, [#allocation10]
        $region24: #{tpu_custom_call.1} parent=11 // pred_fallthru
          _
        // Predicated region
        $region25: #{tpu_custom_call.1} parent=11 // pred_check
          %p253 = pneg %p165
        $region26: #{tpu_custom_call.1} parent=11 // pred_check_branch
          %255 = sbr.rel (%p253) target = $region28
        $region27: #{tpu_custom_call.1} parent=11 // pred_region
          %s257 = ssub.s32 64, 64
          %258 = vsyncadd [#allocation10], %s257
          %s260 = sshll.u32 [#allocation11], 4
          %s261 = int_to_ptr.vmem [resolvable:$true] %s260
          %263 = dma.hbm_to_vmem [thread:$0]  %s4, 64, %s261, [#allocation10]
        $region28: #{tpu_custom_call.1} parent=11 // pred_fallthru
          _
      $region12: #{tpu_custom_call.1} parent=5 // pred_fallthru
        _
      %p264 = scmp.lt.s32.totalorder %s19, 2
      // Predicated region
      $region29: #{tpu_custom_call.1} parent=5 // pred_check
        %p265 = pneg %p264
      $region30: #{tpu_custom_call.1} parent=5 // pred_check_branch
        %267 = sbr.rel (%p265) target = $region32
      $region31: #{tpu_custom_call.1} parent=5 // pred_region
        // Predicated region
        $region33: #{tpu_custom_call.1} parent=31 // pred_check
          %p268 = pneg %p60
        $region34: #{tpu_custom_call.1} parent=31 // pred_check_branch
          %270 = sbr.rel (%p268) target = $region36
        $region35: #{tpu_custom_call.1} parent=31 // pred_region
          %s271 = sand.u32 %s50, 1
          %s272 = scalar_lea.sflag [#allocation4], %s271
          %s273 = sand.u32 %s50, 1
          %s274 = smul.addr %s273, 8
          %s275 = scalar_lea.vmem [#allocation3], %s274
          %s276 = smul.u32 2, %s27
          %s278 = ssub.s32 128, 128
          %279 = vsyncadd %s272, %s278
          %s280 = smul.addr %s26, 2
          %s281 = sadd.s32 %s276, %s280
          %s282 = smul.addr %s281, 64
          %s283 = scalar_lea.hbm %s0, %s282
          %s285 = sshll.u32 %s275, 4
          %s286 = int_to_ptr.vmem [resolvable:$true] %s285
          %288 = dma.hbm_to_vmem [thread:$0]  %s283, 128, %s286, %s272
        $region36: #{tpu_custom_call.1} parent=31 // pred_fallthru
          _
      $region32: #{tpu_custom_call.1} parent=5 // pred_fallthru
        _
      %p289 = scmp.le.s32.totalorder 1, %s19
      %p290 = scmp.lt.s32.totalorder %s19, 3
      %p291 = pnand %p289, %p290
      %p292 = pneg %p291
      // Predicated region
      $region37: #{tpu_custom_call.1} parent=5 // pred_check
        _
      $region38: #{tpu_custom_call.1} parent=5 // pred_check_branch
        %294 = sbr.rel (%p291) target = $region40
      $region39: #{tpu_custom_call.1} parent=5 // pred_region
        %s295 = ssub.s32 %s19, 1
        %s296 = sand.u32 %s53, 1
        %s297 = scalar_lea.sflag [#allocation4], %s296
        %s298 = sand.u32 %s53, 1
        %s299 = smul.addr %s298, 8
        %s300 = scalar_lea.vmem [#allocation3], %s299
        // Predicated region
        $region41: #{tpu_custom_call.1} parent=39 // pred_check
          %p301 = pneg %p66
        $region42: #{tpu_custom_call.1} parent=39 // pred_check_branch
          %303 = sbr.rel (%p301) target = $region44
        $region43: #{tpu_custom_call.1} parent=39 // pred_region
          %304 = dma.done %s297, 128
        $region44: #{tpu_custom_call.1} parent=39 // pred_fallthru
          _
        // Predicated region
        $region45: #{tpu_custom_call.1} parent=39 // pred_check
          %p305 = pneg %p92
        $region46: #{tpu_custom_call.1} parent=39 // pred_check_branch
          %307 = sbr.rel (%p305) target = $region48
        $region47: #{tpu_custom_call.1} parent=39 // pred_region
          %308 = dma.done [#allocation7], 256
        $region48: #{tpu_custom_call.1} parent=39 // pred_fallthru
          _
        // Predicated region
        $region49: #{tpu_custom_call.1} parent=39 // pred_check
          %p309 = pneg %p118
        $region50: #{tpu_custom_call.1} parent=39 // pred_check_branch
          %311 = sbr.rel (%p309) target = $region52
        $region51: #{tpu_custom_call.1} parent=39 // pred_region
          %312 = dma.done [#allocation7], 256
        $region52: #{tpu_custom_call.1} parent=39 // pred_fallthru
          _
        // Predicated region
        $region53: #{tpu_custom_call.1} parent=39 // pred_check
          %p313 = pneg %p144
        $region54: #{tpu_custom_call.1} parent=39 // pred_check_branch
          %315 = sbr.rel (%p313) target = $region56
        $region55: #{tpu_custom_call.1} parent=39 // pred_region
          %316 = dma.done [#allocation10], 64
        $region56: #{tpu_custom_call.1} parent=39 // pred_fallthru
          _
        // Predicated region
        $region57: #{tpu_custom_call.1} parent=39 // pred_check
          %p317 = pneg %p165
        $region58: #{tpu_custom_call.1} parent=39 // pred_check_branch
          %319 = sbr.rel (%p317) target = $region60
        $region59: #{tpu_custom_call.1} parent=39 // pred_region
          %320 = dma.done [#allocation10], 64
        $region60: #{tpu_custom_call.1} parent=39 // pred_fallthru
          _
        %s321 = sand.u32 %s53, 1
        %s322 = scalar_lea.sflag [#allocation4], %s321
        %s323 = sand.u32 %s53, 1
        %s324 = smul.addr %s323, 8
        %s325 = scalar_lea.vmem [#allocation3], %s324
        %p326 = pneg %p66
        %p327 = pneg %p63
        %p328 = pneg %p92
        %p329 = pneg %p89
        %p330 = pneg %p118
        %p331 = pneg %p115
        %p332 = pneg %p144
        %p333 = pneg %p141
        %p334 = pneg %p165
        %p335 = pneg %p162
        %p336 = pneg %p193
        %p337 = pneg %p190
        %s338 = sand.u32 %s180, 1
        %s339 = scalar_lea.sflag [#allocation5], %s338
        %s340 = sand.u32 %s180, 1
        %s341 = smul.addr %s340, 8
        %s342 = scalar_lea.vmem [#allocation12], %s341
        %s343 = smul.u32 2, %s30
        %s344 = smul.u32 2, %s31
        %s345 = smul.u32 2, %s31
        %s346 = smul.u32 2, %s30
        %p347 = scmp.eq.s32.totalorder %s31, 0
        // Predicated region
        $region61: #{tpu_custom_call.1} parent=39 // pred_check
          %p348 = pneg %p347
        $region62: #{tpu_custom_call.1} parent=39 // pred_check_branch
          %350 = sbr.rel (%p348) target = $region64
        $region63: #{tpu_custom_call.1} parent=39 // pred_region
          %351 = vst [vmem:[#allocation2] sm:$0xff] 0.0
        $region64: #{tpu_custom_call.1} parent=39 // pred_fallthru
          _
        %v352 = vld [vmem:[#allocation6] sm:$0xff]
        %v353 = vld [vmem:[#allocation6 + $0x8] sm:$0xff]
        %v354 = vld [vmem:[%s300] sm:$0xff]
        %v355 = vld [vmem:[#allocation8] sm:$0xff]
        %v356 = vld [vmem:[#allocation8 + $0x8] sm:$0xff]
        %358 = vset.pattern.permute.xlu0 0
        %359 = vperm.xlu0 %358, %v355
        %v360 = vpop.permute.xlu0 %359
        %363 = vset.pattern.permute.xlu0 0
        %364 = vperm.xlu0 %363, %v356
        %v365 = vpop.permute.xlu0 %364
        %v368 = vcombine.high %v354, %v354
        %vm369 = vcmask 31744
        %v371 = vsel %vm369, %v352, 0
        %v374 = vsel %vm369, %v353, 0
        %vm376 = vcmask 1043456
        %v377 = vsel %vm376, %v354, 0
        %v379 = vsel %vm376, %v368, 0
        %381 = vmatprep.subr.mxu0 %v379
        %382 = vmatpush1.msra.mxu0 %v377
        %383 = vmatprep.subr.mxu0 0.0
        %384 = vmatpush1.msra.mxu0 0.0
        %385 = vmatprep.subr.mxu0 0.0
        %386 = vmatpush1.msra.mxu0 0.0
        %387 = vmatprep.subr.mxu0 0.0
        %388 = vmatpush1.msra.mxu0 0.0
        %389 = vmatprep.subr.mxu0 0.0
        %390 = vmatpush1.msra.mxu0 0.0
        %391 = vmatprep.subr.mxu0 0.0
        %392 = vmatpush1.msra.mxu0 0.0
        %393 = vmatprep.subr.mxu0 0.0
        %394 = vmatpush1.msra.mxu0 0.0
        %395 = vmatprep.subr.mxu0 0.0
        %396 = vmatpush1.msra.mxu0 0.0
        %397 = vmatprep.subr.mxu0 0.0
        %398 = vmatpush1.msra.mxu0 0.0
        %399 = vmatprep.subr.mxu0 0.0
        %400 = vmatpush1.msra.mxu0 0.0
        %401 = vmatprep.subr.mxu0 0.0
        %402 = vmatpush1.msra.mxu0 0.0
        %403 = vmatprep.subr.mxu0 0.0
        %404 = vmatpush1.msra.mxu0 0.0
        %405 = vmatprep.subr.mxu0 0.0
        %406 = vmatpush1.msra.mxu0 0.0
        %407 = vmatprep.subr.mxu0 0.0
        %408 = vmatpush1.msra.mxu0 0.0
        %409 = vmatprep.subr.mxu0 0.0
        %410 = vmatpush1.msra.mxu0 0.0
        %411 = vmatprep.subr.mxu0 0.0
        %412 = vmatpush1.msra.mxu0 0.0
        %413 = vmatprep.subr.mxu0 0.0
        %414 = vmatpush1.msra.mxu0 0.0
        %415 = vmatprep.subr.mxu0 0.0
        %416 = vmatpush1.msra.mxu0 0.0
        %417 = vmatprep.subr.mxu0 0.0
        %418 = vmatpush1.msra.mxu0 0.0
        %419 = vmatprep.subr.mxu0 0.0
        %420 = vmatpush1.msra.mxu0 0.0
        %421 = vmatprep.subr.mxu0 0.0
        %422 = vmatpush1.msra.mxu0 0.0
        %423 = vmatprep.subr.mxu0 0.0
        %424 = vmatpush1.msra.mxu0 0.0
        %425 = vmatprep.subr.mxu0 0.0
        %426 = vmatpush1.msra.mxu0 0.0
        %427 = vmatprep.subr.mxu0 0.0
        %428 = vmatpush1.msra.mxu0 0.0
        %429 = vmatprep.subr.mxu0 0.0
        %430 = vmatpush1.msra.mxu0 0.0
        %431 = vmatprep.subr.mxu0 0.0
        %432 = vmatpush1.msra.mxu0 0.0
        %433 = vmatprep.subr.mxu0 0.0
        %434 = vmatpush1.msra.mxu0 0.0
        %435 = vmatprep.subr.mxu0 0.0
        %436 = vmatpush1.msra.mxu0 0.0
        %437 = vmatprep.subr.mxu0 0.0
        %438 = vmatpush1.msra.mxu0 0.0
        %439 = vmatprep.subr.mxu0 0.0
        %440 = vmatpush1.msra.mxu0 0.0
        %441 = vmatprep.subr.mxu0 0.0
        %442 = vmatpush1.msra.mxu0 0.0
        %443 = vmatprep.subr.mxu0 0.0
        %444 = vmatpush1.msra.mxu0 0.0
        %445 = vmatprep.mubr.f32.mxu0 0.0
        %446 = vmatmul.mubr.f32.gmra.mrb[0].mxu0 %v371
        %v447 = vpop.f32.mrb[0].mxu0
        %v448 = vadd.f32 %v360, %v447
        %v449 = vpop.f32.mrb[0].mxu0
        %v450 = vadd.f32 %v360, %v449
        %451 = vmatprep.mubr.f32.mxu0 0.0
        %452 = vmatmul.mubr.f32.gmra.mrb[0].mxu0 %v374
        %v453 = vpop.f32.mrb[0].mxu0
        %v454 = vadd.f32 %v365, %v453
        %v455 = vpop.f32.mrb[0].mxu0
        %v456 = vadd.f32 %v365, %v455
        %457 = vdwg.mxu0
        %v458 = vmul.f32 %v448, 0.5
        %v459 = vmul.f32 %v450, 0.5
        %v460 = vmul.f32 %v454, 0.5
        %v461 = vmul.f32 %v456, 0.5
        %v462 = vmul.f32 %v448, 0.70710677
        %v463 = vmul.f32 %v450, 0.70710677
        %v464 = vmul.f32 %v454, 0.70710677
        %v465 = vmul.f32 %v456, 0.70710677
        %v466 = verf.f32.pop %v462
        %v467 = verf.f32.pop %v463
        %v468 = verf.f32.pop %v464
        %v469 = verf.f32.pop %v465
        %v470 = vadd.f32 %v466, 1.0
        %v471 = vadd.f32 %v467, 1.0
        %v472 = vadd.f32 %v468, 1.0
        %v473 = vadd.f32 %v469, 1.0
        %v474 = vmul.f32 %v458, %v470
        %v475 = vmul.f32 %v459, %v471
        %v476 = vmul.f32 %v460, %v472
        %v477 = vmul.f32 %v461, %v473
        %v478 = vld [vmem:[#allocation2] sm:$0xff]
        %v479 = vld [vmem:[#allocation9] sm:$0xf]
        %vm480 = vcmask 130048
        %v482 = vsel %vm480, %v479, 0
        %484 = vmatprep.subr.mxu0 %v475
        %485 = vmatpush1.msra.mxu0 %v474
        %486 = vmatprep.subr.mxu0 %v477
        %487 = vmatpush1.msra.mxu0 %v476
        %488 = vmatprep.subr.mxu0 0.0
        %489 = vmatpush1.msra.mxu0 0.0
        %490 = vmatprep.subr.mxu0 0.0
        %491 = vmatpush1.msra.mxu0 0.0
        %492 = vmatprep.subr.mxu0 0.0
        %493 = vmatpush1.msra.mxu0 0.0
        %494 = vmatprep.subr.mxu0 0.0
        %495 = vmatpush1.msra.mxu0 0.0
        %496 = vmatprep.subr.mxu0 0.0
        %497 = vmatpush1.msra.mxu0 0.0
        %498 = vmatprep.subr.mxu0 0.0
        %499 = vmatpush1.msra.mxu0 0.0
        %500 = vmatprep.subr.mxu0 0.0
        %501 = vmatpush1.msra.mxu0 0.0
        %502 = vmatprep.subr.mxu0 0.0
        %503 = vmatpush1.msra.mxu0 0.0
        %504 = vmatprep.subr.mxu0 0.0
        %505 = vmatpush1.msra.mxu0 0.0
        %506 = vmatprep.subr.mxu0 0.0
        %507 = vmatpush1.msra.mxu0 0.0
        %508 = vmatprep.subr.mxu0 0.0
        %509 = vmatpush1.msra.mxu0 0.0
        %510 = vmatprep.subr.mxu0 0.0
        %511 = vmatpush1.msra.mxu0 0.0
        %512 = vmatprep.subr.mxu0 0.0
        %513 = vmatpush1.msra.mxu0 0.0
        %514 = vmatprep.subr.mxu0 0.0
        %515 = vmatpush1.msra.mxu0 0.0
        %516 = vmatprep.subr.mxu0 0.0
        %517 = vmatpush1.msra.mxu0 0.0
        %518 = vmatprep.subr.mxu0 0.0
        %519 = vmatpush1.msra.mxu0 0.0
        %520 = vmatprep.subr.mxu0 0.0
        %521 = vmatpush1.msra.mxu0 0.0
        %522 = vmatprep.subr.mxu0 0.0
        %523 = vmatpush1.msra.mxu0 0.0
        %524 = vmatprep.subr.mxu0 0.0
        %525 = vmatpush1.msra.mxu0 0.0
        %526 = vmatprep.subr.mxu0 0.0
        %527 = vmatpush1.msra.mxu0 0.0
        %528 = vmatprep.subr.mxu0 0.0
        %529 = vmatpush1.msra.mxu0 0.0
        %530 = vmatprep.subr.mxu0 0.0
        %531 = vmatpush1.msra.mxu0 0.0
        %532 = vmatprep.subr.mxu0 0.0
        %533 = vmatpush1.msra.mxu0 0.0
        %534 = vmatprep.subr.mxu0 0.0
        %535 = vmatpush1.msra.mxu0 0.0
        %536 = vmatprep.subr.mxu0 0.0
        %537 = vmatpush1.msra.mxu0 0.0
        %538 = vmatprep.subr.mxu0 0.0
        %539 = vmatpush1.msra.mxu0 0.0
        %540 = vmatprep.subr.mxu0 0.0
        %541 = vmatpush1.msra.mxu0 0.0
        %542 = vmatprep.subr.mxu0 0.0
        %543 = vmatpush1.msra.mxu0 0.0
        %544 = vmatprep.subr.mxu0 0.0
        %545 = vmatpush1.msra.mxu0 0.0
        %546 = vmatprep.subr.mxu0 0.0
        %547 = vmatpush1.msra.mxu0 0.0
        %548 = vmatprep.mubr.f32.mxu0 0.0
        %549 = vmatmul.mubr.f32.gmra.mrb[0].mxu0 %v482
        %v550 = vpop.f32.mrb[0].mxu0
        %v551 = vadd.f32 0.0, %v550
        %v552 = vpop.f32.mrb[0].mxu0
        %v553 = vadd.f32 0.0, %v552
        %554 = vdwg.mxu0
        %v557 = vcombine.low %v551, %v553
        %v559 = vadd.f32 %v478, %v557
        %560 = vst [vmem:[#allocation2] sm:$0xff] %v559
        // Predicated region
        $region65: #{tpu_custom_call.1} parent=39 // pred_check
          %p561 = pneg %p347
        $region66: #{tpu_custom_call.1} parent=39 // pred_check_branch
          %563 = sbr.rel (%p561) target = $region68
        $region67: #{tpu_custom_call.1} parent=39 // pred_region
          %v564 = vld [vmem:[#allocation2] sm:$0xff]
          %v565 = vld [vmem:[#allocation11] sm:$0xf]
          %567 = vset.pattern.permute.xlu0 0
          %568 = vperm.xlu0 %567, %v565
          %v569 = vpop.permute.xlu0 %568
          %v571 = vunpack.c.l.s4 839922192
          %v572 = vunpack.c.0.s8 %v571
          %v573 = vlaneseq
          %v574 = vshrl.u32 %v573, 7
          %v575 = vsub.s32 %v572, %v574
          %v576 = vrot.slane %v569, %v575
          %v578 = vadd.f32 %v564, %v576
          %579 = vst [vmem:[%s342] sm:$0xff] %v578
        $region68: #{tpu_custom_call.1} parent=39 // pred_fallthru
          _
        %s580 = sand.u32 %s180, 1
        %s581 = scalar_lea.sflag [#allocation5], %s580
        %s582 = sand.u32 %s180, 1
        %s583 = smul.addr %s582, 8
        %s584 = scalar_lea.vmem [#allocation12], %s583
        // Predicated region
        $region69: #{tpu_custom_call.1} parent=39 // pred_check
          %p585 = pneg %p190
        $region70: #{tpu_custom_call.1} parent=39 // pred_check_branch
          %587 = sbr.rel (%p585) target = $region72
        $region71: #{tpu_custom_call.1} parent=39 // pred_region
          %s588 = smul.u32 2, %s30
          %s590 = ssub.s32 128, 128
          %591 = vsyncadd %s581, %s590
          %s592 = smul.addr %s29, 2
          %s593 = sadd.s32 %s588, %s592
          %s594 = smul.addr %s593, 64
          %s595 = scalar_lea.hbm %s5, %s594
          %s597 = sshll.u32 %s584, 4
          %s598 = int_to_ptr.vmem [resolvable:$true] %s597
          %600 = dma.vmem_to_hbm [thread:$0]  %s598, 128, %s595, %s581
        $region72: #{tpu_custom_call.1} parent=39 // pred_fallthru
          _
      $region40: #{tpu_custom_call.1} parent=5 // pred_fallthru
        _
      %p601 = scmp.le.s32.totalorder 2, %s19
      // Predicated region
      $region73: #{tpu_custom_call.1} parent=5 // pred_check
        %p602 = pneg %p601
      $region74: #{tpu_custom_call.1} parent=5 // pred_check_branch
        %604 = sbr.rel (%p602) target = $region76
      $region75: #{tpu_custom_call.1} parent=5 // pred_region
        %s605 = ssub.s32 %s19, 2
        // Predicated region
        $region77: #{tpu_custom_call.1} parent=75 // pred_check
          %p606 = pneg %p196
        $region78: #{tpu_custom_call.1} parent=75 // pred_check_branch
          %608 = sbr.rel (%p606) target = $region80
        $region79: #{tpu_custom_call.1} parent=75 // pred_region
          %s609 = sand.u32 %s181, 1
          %s610 = scalar_lea.sflag [#allocation5], %s609
          %s611 = sand.u32 %s181, 1
          %s612 = smul.addr %s611, 8
          %s613 = scalar_lea.vmem [#allocation12], %s612
          %614 = dma.done %s610, 128
        $region80: #{tpu_custom_call.1} parent=75 // pred_fallthru
          _
      $region76: #{tpu_custom_call.1} parent=5 // pred_fallthru
        _
    $region6: #{tpu_custom_call.1} parent=1 // loop_footer
      %s23 = sadd.s32 1, %s19
    $region7: #{tpu_custom_call.1} parent=1 // loop_footer_branch
      %18 = sbr.rel target = $region3
    $region8: #{tpu_custom_call.1} parent=1 // loop_exit
      _
    %615 = vsyncpa [#allocation4], 1
    %s616 = scalar_lea.sflag [#allocation4], 1
    %617 = vsyncpa %s616, 1
    %618 = vsyncpa [#allocation7], 1
    %619 = vsyncpa [#allocation10], 1
    %620 = vsyncpa [#allocation5], 1
    %s621 = scalar_lea.sflag [#allocation5], 1
    %622 = vsyncpa %s621, 1

</llo_original>
